<compile_context>
chip_gen: v7x
topology: tpu7x:2x2x1
jax: 0.10.0
libtpu: 0.0.40
codegen_flags: <defaults>
</compile_context>

<pallas_src>
import math
import functools

import jax
import jax.numpy as jnp
from jax.experimental import pallas as pl
from jax.experimental.pallas import tpu as pltpu

_LANE = 128
_SUBLANE = 8


def _round_up(a: int, b: int) -> int:
    return (a + b - 1) // b * b


def _cheb_kernel(coffs_ref, x_ref, o_ref, *, K: int):
    # coffs_ref: (K, Cp) in VMEM (constant index_map -> DMA'd once across grid)
    # x_ref / o_ref: (tm, Cp) lane-dense tiles in VMEM.
    x = x_ref[...].astype(jnp.float32)
    c = coffs_ref[...].astype(jnp.float32)

    x2 = x + x                              # hoisted 2*x
    t0 = jnp.ones_like(x)                   # T0
    t1 = x                                  # T1
    out = c[1:2, :] * t1 + c[0:1, :]        # coffs[1]*T1 + coffs[0]*T0 (T0 == 1)

    # K is a small static integer -> plain Python unrolled recurrence
    for k in range(2, K):
        t2 = x2 * t1 - t0
        out = out + c[k:k + 1, :] * t2
        t0, t1 = t1, t2

    o_ref[...] = out.astype(o_ref.dtype)


def chebyshev_ploy_pallas(x: jax.Array, coffs: jax.Array,
                          *, target_block_bytes: int = 4 * 1024 * 1024) -> jax.Array:
    """x: (*, C); coffs: (K, C). Returns same shape/dtype as x."""
    K, C = coffs.shape
    assert K >= 2, "chebyshev_ploy requires K >= 2"
    orig_shape = x.shape
    assert orig_shape[-1] == C
    N = math.prod(orig_shape[:-1])
    x_flat = x.reshape(N, C)
    itemsize = jnp.dtype(x.dtype).itemsize

    # ---- lane-dense repack: fold R consecutive rows into the lane axis ----
    if C < _LANE and _LANE % C == 0:
        R = _LANE // C
    else:
        R = 1  # C already >= 128 (or awkward); keep layout as-is
    Cp = C * R
    M = -(-N // R)  # rows in packed layout (pre-padding)

    # ---- row tile: big blocks (HBM-bandwidth bound), VMEM-safe everywhere ----
    tm = max(_SUBLANE,
             (target_block_bytes // (Cp * itemsize)) // _SUBLANE * _SUBLANE)
    M_aligned = _round_up(M, _SUBLANE)
    tm = min(tm, M_aligned)
    # keep >= 2 grid steps when there is enough work (v7x: 2 TCs share the grid)
    if -(-M // tm) == 1 and M_aligned >= 2 * _SUBLANE:
        tm = _round_up(-(-M_aligned // 2), _SUBLANE)

    grid_m = -(-M // tm)
    M_pad = grid_m * tm
    N_pad = M_pad * R

    if N_pad != N:
        x_flat = jnp.pad(x_flat, ((0, N_pad - N), (0, 0)))
    x_packed = x_flat.reshape(M_pad, Cp)
    coffs_packed = jnp.tile(coffs, (1, R)) if R > 1 else coffs

    out_packed = pl.pallas_call(
        functools.partial(_cheb_kernel, K=K),
        out_shape=jax.ShapeDtypeStruct((M_pad, Cp), x.dtype),
        grid_spec=pltpu.PrefetchScalarGridSpec(
            num_scalar_prefetch=0,
            grid=(grid_m,),
            in_specs=[
                # constant index_map -> coefficients are copied into VMEM once
                pl.BlockSpec((K, Cp), lambda i: (0, 0)),
                pl.BlockSpec((tm, Cp), lambda i: (i, 0)),
            ],
            out_specs=pl.BlockSpec((tm, Cp), lambda i: (i, 0)),
        ),
        compiler_params=pltpu.CompilerParams(
            dimension_semantics=("parallel",),
            vmem_limit_bytes=32 * 1024 * 1024,
        ),
    )(coffs_packed, x_packed)

    return out_packed.reshape(N_pad, C)[:N].reshape(orig_shape)


def chebyshev_ploy_ref(x: jax.Array, coffs: jax.Array) -> jax.Array:
    """Pure-JAX reference mirroring the PyTorch forward."""
    K = coffs.shape[0]
    t0 = jnp.ones_like(x)
    t1 = x
    out = coffs[0] * t0 + coffs[1] * t1
    for k in range(2, K):
        t2 = 2.0 * t1 * x - t0
        out = out + coffs[k] * t2
        t0, t1 = t1, t2
    return out


def glorot_init(key, K: int, channels: int) -> jax.Array:
    # glorot for a (1, channels) parameter: U(-s, s), s = sqrt(6 / (1 + channels))
    s = math.sqrt(6.0 / (1 + channels))
    return jax.random.uniform(key, (K, channels), jnp.float32, minval=-s, maxval=s)


if __name__ == "__main__":
    K = 4
    channels = 32
    key = jax.random.PRNGKey(0)
    kx, kc = jax.random.split(key)

    # x: (*, channels) -> small leading dims (batch=2, seq=8, spatial=16)
    x = jax.random.normal(kx, (2, 8, 16, channels), jnp.float32)
    coffs = glorot_init(kc, K, channels)  # one (1, channels) coeff row per lin

    out = chebyshev_ploy_pallas(x, coffs)
    jax.block_until_ready(out)

    ref = chebyshev_ploy_ref(x, coffs)
    assert out.shape == x.shape and out.dtype == x.dtype
    assert jnp.allclose(out, ref, atol=1e-5, rtol=1e-5), "mismatch vs reference"

    print("KERNEL_OK")
</pallas_src>

<mosaic_0001>
module attributes {stable_mosaic.version = 11 : i64} {
  func.func @_cheb_kernel(%arg0: i32, %arg1: memref<4x128xf32, #tpu.memory_space<vmem>>, %arg2: memref<32x128xf32, #tpu.memory_space<vmem>>, %arg3: memref<32x128xf32, #tpu.memory_space<vmem>>) attributes {dimension_semantics = [#tpu.dimension_semantics<parallel>], iteration_bounds = array<i64: 2>, scalar_prefetch = 0 : i64, scratch_operands = 0 : i64, tpu.core_type = #tpu.core_type<tc>, window_params = [{pipeline_mode = #tpu.pipeline_mode<synchronous>, transform_indices = @transform_0, window_bounds = array<i64: 4, 128>}, {transform_indices = @transform_1, window_bounds = array<i64: 32, 128>}, {transform_indices = @transform_2, window_bounds = array<i64: 32, 128>}]} {
    %c0 = arith.constant 0 : index
    %c0_0 = arith.constant 0 : index
    %0 = vector.load %arg2[%c0, %c0_0] : memref<32x128xf32, #tpu.memory_space<vmem>>, vector<32x128xf32>
    %c0_1 = arith.constant 0 : index
    %c0_2 = arith.constant 0 : index
    %1 = vector.load %arg1[%c0_1, %c0_2] : memref<4x128xf32, #tpu.memory_space<vmem>>, vector<4x128xf32>
    %2 = arith.addf %0, %0 : vector<32x128xf32>
    %cst = arith.constant 1.000000e+00 : f32
    %3 = vector.broadcast %cst : f32 to vector<32x128xf32>
    %4 = vector.extract_strided_slice %1 {offsets = [1, 0], sizes = [1, 128], strides = [1, 1]} : vector<4x128xf32> to vector<1x128xf32>
    %5 = vector.broadcast %4 : vector<1x128xf32> to vector<32x128xf32>
    %6 = arith.mulf %5, %0 : vector<32x128xf32>
    %7 = vector.extract_strided_slice %1 {offsets = [0, 0], sizes = [1, 128], strides = [1, 1]} : vector<4x128xf32> to vector<1x128xf32>
    %8 = vector.broadcast %7 : vector<1x128xf32> to vector<32x128xf32>
    %9 = arith.addf %6, %8 : vector<32x128xf32>
    %10 = arith.mulf %2, %0 : vector<32x128xf32>
    %11 = arith.subf %10, %3 : vector<32x128xf32>
    %12 = vector.extract_strided_slice %1 {offsets = [2, 0], sizes = [1, 128], strides = [1, 1]} : vector<4x128xf32> to vector<1x128xf32>
    %13 = vector.broadcast %12 : vector<1x128xf32> to vector<32x128xf32>
    %14 = arith.mulf %13, %11 : vector<32x128xf32>
    %15 = arith.addf %9, %14 : vector<32x128xf32>
    %16 = arith.mulf %2, %11 : vector<32x128xf32>
    %17 = arith.subf %16, %0 : vector<32x128xf32>
    %18 = vector.extract_strided_slice %1 {offsets = [3, 0], sizes = [1, 128], strides = [1, 1]} : vector<4x128xf32> to vector<1x128xf32>
    %19 = vector.broadcast %18 : vector<1x128xf32> to vector<32x128xf32>
    %20 = arith.mulf %19, %17 : vector<32x128xf32>
    %21 = arith.addf %15, %20 : vector<32x128xf32>
    %c0_3 = arith.constant 0 : index
    %c0_4 = arith.constant 0 : index
    %22 = vector.load %arg3[%c0_3, %c0_4] : memref<32x128xf32, #tpu.memory_space<vmem>>, vector<32x128xf32>
    tpu.vector_store %arg3[%c0_3, %c0_4], %21 {strides = array<i32>} : memref<32x128xf32, #tpu.memory_space<vmem>>, vector<32x128xf32>,
    return
  }
  func.func @transform_0(%arg0: i32) -> (i32, i32) {
    %c0_i32 = arith.constant 0 : i32
    %c0_i32_0 = arith.constant 0 : i32
    %c0_i32_1 = arith.constant 0 : i32
    return %c0_i32, %c0_i32_0 : i32, i32
  }
  func.func @transform_1(%arg0: i32) -> (i32, i32) {
    %c0_i32 = arith.constant 0 : i32
    %c0_i32_0 = arith.constant 0 : i32
    return %arg0, %c0_i32 : i32, i32
  }
  func.func @transform_2(%arg0: i32) -> (i32, i32) {
    %c0_i32 = arith.constant 0 : i32
    %c0_i32_0 = arith.constant 0 : i32
    return %arg0, %c0_i32 : i32, i32
  }
}

</mosaic_0001>

<llo_original>
// kernel: tpu_custom_call.1
$region0: #{tpu_custom_call.1}
  #allocation0 [shape = 'u32[]', space=smem, size = 0x4, offset = 0x4, fixed_abs, tag = 'smem constant byte address 0x4 - core index']
  #allocation1 [shape = 'u32[144,128]{1,0:T(1,128)}', space=vmem, size = 0x12000, scoped, tag = 'internal scratch']
  %s0 = inlined_call_operand.hbm [shape: f32[4,128], index: 0, kind: input, shape index: {}]
  %s1 = inlined_call_operand.hbm [shape: f32[64,128], index: 1, kind: input, shape index: {}]
  %s2 = inlined_call_operand.hbm [shape: f32[64,128], index: 2, kind: output, shape index: {}]
  %s3 = sld [smem:[#allocation0]]
  $region49: #{tpu_custom_call.1} parent=0
    _
  %s5 = ssub.s32 1, %s3
  %s6 = scalar_select 0, %s5, %s3
  $region1: #{tpu_custom_call.1} parent=0
    #allocation2 [shape = 'u8[2048]{0}', space=vmem, size = 0x800, scoped, tag = 'input window, operand 0, single buffered']
    #allocation3 [shape = 's32[2]{0}', space=sflag, size = 0x8, scoped, tag = 'scoped memory for tpu_custom_call.1']
    #allocation4 [shape = 's32[2]{0}', space=sflag, size = 0x8, scoped, tag = 'scoped memory for tpu_custom_call.1']
    #allocation5 [shape = 'u8[32768]{0}', space=vmem, size = 0x8000, scoped, tag = 'input window, operand 1']
    #allocation6 [shape = 's32[2]{0}', space=sflag, size = 0x8, scoped, tag = 'scoped memory for tpu_custom_call.1']
    #allocation7 [shape = 'u8[32768]{0}', space=vmem, size = 0x8000, scoped, tag = 'output window, operand 0']
    %7 = vsyncpa [#allocation3], 0
    %8 = vsyncpa [#allocation6], 0
    %s9 = scalar_lea.sflag [#allocation6], 1
    %10 = vsyncpa %s9, 0
    %11 = vsyncpa [#allocation4], 0
    %s12 = scalar_lea.sflag [#allocation4], 1
    %13 = vsyncpa %s12, 0
    loop: start=0, step=1, limit=4
    $region2: #{tpu_custom_call.1} parent=1 // loop_pre_header
      _
    $region3: #{tpu_custom_call.1} parent=1 // loop_header
      %s15 = sphi 0, %s19
      %p16 = scmp.ge.s32.totalorder %s15, 4
      %s23 = sphi 0, %s23
      %s25 = sphi 0, %s23
      %s26 = sphi 0, %s25
      %s40 = sphi 0, %s26
      %s46 = sphi 0, %s48
      %s49 = sphi 0, %s46
      %s50 = sphi 0, %s49
      %s66 = sphi 0, %s50
      %s72 = sphi 0, %s74
      %s75 = sphi 0, %s72
      %s76 = sphi 0, %s75
      %s92 = sphi 0, %s76
    $region4: #{tpu_custom_call.1} parent=1 // loop_header_branch
      %18 = sbr.rel (%p16) target = $region8
    $region5: #{tpu_custom_call.1} parent=1 // loop_body
      %s20 = ssub.s32 %s15, 1
      %s21 = ssub.s32 %s15, 2
      %s22 = sadd.s32 %s15, 1
      %s24 = sadd.s32 %s23, 1
      %p27 = scmp.eq.s32.totalorder %s15, 1
      %p28 = scmp.ne.s32.totalorder %s23, %s25
      %p29 = scmp.eq.s32.totalorder %s15, 0
      %p30 = por %p28, %p29
      %p31 = scmp.ne.s32.totalorder %s23, %s25
      %p32 = scmp.eq.s32.totalorder %s20, 1
      %p33 = por %p31, %p32
      %p34 = scmp.ne.s32.totalorder %s25, %s26
      %p35 = scmp.eq.s32.totalorder %s20, 0
      %p36 = por %p34, %p35
      %p37 = scmp.ne.s32.totalorder %s25, %s26
      %p38 = scmp.eq.s32.totalorder %s21, 1
      %p39 = por %p37, %p38
      %p41 = scmp.ne.s32.totalorder %s26, %s40
      %p42 = scmp.eq.s32.totalorder %s21, 0
      %p43 = por %p41, %p42
      %s44 = ssub.s32 %s15, %s22
      %p45 = scmp.eq.s32.totalorder %s44, 0
      %s47 = sadd.s32 %s46, 1
      %s48 = scalar_select %p45, %s46, %s47
      %p51 = pneg %p45
      %p52 = scmp.eq.s32.totalorder %s15, 1
      %p53 = por %p51, %p52
      %p54 = scmp.ne.s32.totalorder %s46, %s49
      %p55 = scmp.eq.s32.totalorder %s15, 0
      %p56 = por %p54, %p55
      %p57 = scmp.ne.s32.totalorder %s46, %s49
      %p58 = scmp.eq.s32.totalorder %s20, 1
      %p59 = por %p57, %p58
      %p60 = scmp.ne.s32.totalorder %s49, %s50
      %p61 = scmp.eq.s32.totalorder %s20, 0
      %p62 = por %p60, %p61
      %p63 = scmp.ne.s32.totalorder %s49, %s50
      %p64 = scmp.eq.s32.totalorder %s21, 1
      %p65 = por %p63, %p64
      %p67 = scmp.ne.s32.totalorder %s50, %s66
      %p68 = scmp.eq.s32.totalorder %s21, 0
      %p69 = por %p67, %p68
      %s70 = ssub.s32 %s15, %s22
      %p71 = scmp.eq.s32.totalorder %s70, 0
      %s73 = sadd.s32 %s72, 1
      %s74 = scalar_select %p71, %s72, %s73
      %p77 = pneg %p71
      %p78 = scmp.eq.s32.totalorder %s15, 1
      %p79 = por %p77, %p78
      %p80 = scmp.ne.s32.totalorder %s72, %s75
      %p81 = scmp.eq.s32.totalorder %s15, 0
      %p82 = por %p80, %p81
      %p83 = scmp.ne.s32.totalorder %s72, %s75
      %p84 = scmp.eq.s32.totalorder %s20, 1
      %p85 = por %p83, %p84
      %p86 = scmp.ne.s32.totalorder %s75, %s76
      %p87 = scmp.eq.s32.totalorder %s20, 0
      %p88 = por %p86, %p87
      %p89 = scmp.ne.s32.totalorder %s75, %s76
      %p90 = scmp.eq.s32.totalorder %s21, 1
      %p91 = por %p89, %p90
      %p93 = scmp.ne.s32.totalorder %s76, %s92
      %p94 = scmp.eq.s32.totalorder %s21, 0
      %p95 = por %p93, %p94
      %p96 = scmp.le.s32.totalorder 1, %s15
      %p97 = scmp.lt.s32.totalorder %s15, 3
      %p98 = pnand %p96, %p97
      %p99 = pneg %p98
      // Predicated region
      $region9: #{tpu_custom_call.1} parent=5 // pred_check
        _
      $region10: #{tpu_custom_call.1} parent=5 // pred_check_branch
        %101 = sbr.rel (%p98) target = $region12
      $region11: #{tpu_custom_call.1} parent=5 // pred_region
        %s102 = ssub.s32 %s15, 1
        // Predicated region
        $region13: #{tpu_custom_call.1} parent=11 // pred_check
          %p103 = pneg %p36
        $region14: #{tpu_custom_call.1} parent=11 // pred_check_branch
          %105 = sbr.rel (%p103) target = $region16
        $region15: #{tpu_custom_call.1} parent=11 // pred_region
          %s107 = ssub.s32 64, 64
          %108 = vsyncadd [#allocation3], %s107
          %s110 = sshll.u32 [#allocation2], 4
          %s111 = int_to_ptr.vmem [resolvable:$true] %s110
          %113 = dma.hbm_to_vmem [thread:$0]  %s0, 64, %s111, [#allocation3]
        $region16: #{tpu_custom_call.1} parent=11 // pred_fallthru
          _
      $region12: #{tpu_custom_call.1} parent=5 // pred_fallthru
        _
      %p114 = scmp.lt.s32.totalorder %s15, 2
      // Predicated region
      $region17: #{tpu_custom_call.1} parent=5 // pred_check
        %p115 = pneg %p114
      $region18: #{tpu_custom_call.1} parent=5 // pred_check_branch
        %117 = sbr.rel (%p115) target = $region20
      $region19: #{tpu_custom_call.1} parent=5 // pred_region
        // Predicated region
        $region21: #{tpu_custom_call.1} parent=19 // pred_check
          %p118 = pneg %p56
        $region22: #{tpu_custom_call.1} parent=19 // pred_check_branch
          %120 = sbr.rel (%p118) target = $region24
        $region23: #{tpu_custom_call.1} parent=19 // pred_region
          %s121 = sand.u32 %s46, 1
          %s122 = scalar_lea.sflag [#allocation6], %s121
          %s123 = sand.u32 %s46, 1
          %s124 = smul.addr %s123, 32
          %s125 = scalar_lea.vmem [#allocation5], %s124
          %s126 = smul.u32 4, %s15
          %s128 = ssub.s32 512, 512
          %129 = vsyncadd %s122, %s128
          %s130 = smul.addr %s126, 128
          %s131 = scalar_lea.hbm %s1, %s130
          %s132 = sshll.u32 %s125, 4
          %s133 = int_to_ptr.vmem [resolvable:$true] %s132
          %138 = dma.hbm_to_vmem [thread:$0]  %s131, 512, %s133, %s122, 128, 128, 8
        $region24: #{tpu_custom_call.1} parent=19 // pred_fallthru
          _
      $region20: #{tpu_custom_call.1} parent=5 // pred_fallthru
        _
      %p139 = scmp.le.s32.totalorder 1, %s15
      %p140 = scmp.lt.s32.totalorder %s15, 3
      %p141 = pnand %p139, %p140
      %p142 = pneg %p141
      // Predicated region
      $region25: #{tpu_custom_call.1} parent=5 // pred_check
        _
      $region26: #{tpu_custom_call.1} parent=5 // pred_check_branch
        %144 = sbr.rel (%p141) target = $region28
      $region27: #{tpu_custom_call.1} parent=5 // pred_region
        %s145 = ssub.s32 %s15, 1
        // Predicated region
        $region29: #{tpu_custom_call.1} parent=27 // pred_check
          %p146 = pneg %p36
        $region30: #{tpu_custom_call.1} parent=27 // pred_check_branch
          %148 = sbr.rel (%p146) target = $region32
        $region31: #{tpu_custom_call.1} parent=27 // pred_region
          %149 = dma.done [#allocation3], 64
        $region32: #{tpu_custom_call.1} parent=27 // pred_fallthru
          _
        %s150 = sand.u32 %s49, 1
        %s151 = scalar_lea.sflag [#allocation6], %s150
        %s152 = sand.u32 %s49, 1
        %s153 = smul.addr %s152, 32
        %s154 = scalar_lea.vmem [#allocation5], %s153
        // Predicated region
        $region33: #{tpu_custom_call.1} parent=27 // pred_check
          %p155 = pneg %p62
        $region34: #{tpu_custom_call.1} parent=27 // pred_check_branch
          %157 = sbr.rel (%p155) target = $region36
        $region35: #{tpu_custom_call.1} parent=27 // pred_region
          %158 = dma.done %s151, 512
        $region36: #{tpu_custom_call.1} parent=27 // pred_fallthru
          _
        %p159 = pneg %p36
        %p160 = pneg %p33
        %s161 = sand.u32 %s49, 1
        %s162 = scalar_lea.sflag [#allocation6], %s161
        %s163 = sand.u32 %s49, 1
        %s164 = smul.addr %s163, 32
        %s165 = scalar_lea.vmem [#allocation5], %s164
        %p166 = pneg %p62
        %p167 = pneg %p59
        %p168 = pneg %p88
        %p169 = pneg %p85
        %s170 = sand.u32 %s75, 1
        %s171 = scalar_lea.sflag [#allocation4], %s170
        %s172 = sand.u32 %s75, 1
        %s173 = smul.addr %s172, 32
        %s174 = scalar_lea.vmem [#allocation7], %s173
        %s175 = smul.u32 4, %s20
        %s176 = smul.u32 4, %s20
        %v177 = vld [vmem:[%s154] sm:$0xff]
        %v178 = vld [vmem:[%s154 + $0x8] sm:$0xff]
        %v179 = vld [vmem:[%s154 + $0x10] sm:$0xff]
        %v180 = vld [vmem:[%s154 + $0x18] sm:$0xff]
        %v181 = vld [vmem:[#allocation2] sm:$0xf]
        %v182 = vadd.f32 %v177, %v177
        %v183 = vadd.f32 %v178, %v178
        %v184 = vadd.f32 %v179, %v179
        %v185 = vadd.f32 %v180, %v180
        %v186 = vlaneseq
        %v187 = vshrl.u32 %v186, 7
        %v188 = vsub.s32 1, %v187
        %v189 = vrot.slane %v181, %v188
        %v190 = vmul.f32 %v189, %v177
        %v191 = vmul.f32 %v189, %v178
        %v192 = vmul.f32 %v189, %v179
        %v193 = vmul.f32 %v189, %v180
        %v194 = vlaneseq
        %v195 = vshrl.u32 %v194, 7
        %v196 = vsub.s32 0, %v195
        %v197 = vrot.slane %v181, %v196
        %v198 = vadd.f32 %v190, %v197
        %v199 = vadd.f32 %v191, %v197
        %v200 = vadd.f32 %v192, %v197
        %v201 = vadd.f32 %v193, %v197
        %v202 = vmul.f32 %v182, %v177
        %v203 = vmul.f32 %v183, %v178
        %v204 = vmul.f32 %v184, %v179
        %v205 = vmul.f32 %v185, %v180
        %v206 = vsub.f32 %v202, 1.0
        %v207 = vsub.f32 %v203, 1.0
        %v208 = vsub.f32 %v204, 1.0
        %v209 = vsub.f32 %v205, 1.0
        %v210 = vlaneseq
        %v211 = vshrl.u32 %v210, 7
        %v212 = vsub.s32 2, %v211
        %v213 = vrot.slane %v181, %v212
        %v214 = vmul.f32 %v213, %v206
        %v215 = vmul.f32 %v213, %v207
        %v216 = vmul.f32 %v213, %v208
        %v217 = vmul.f32 %v213, %v209
        %v218 = vadd.f32 %v198, %v214
        %v219 = vadd.f32 %v199, %v215
        %v220 = vadd.f32 %v200, %v216
        %v221 = vadd.f32 %v201, %v217
        %v222 = vmul.f32 %v182, %v206
        %v223 = vmul.f32 %v183, %v207
        %v224 = vmul.f32 %v184, %v208
        %v225 = vmul.f32 %v185, %v209
        %v226 = vsub.f32 %v222, %v177
        %v227 = vsub.f32 %v223, %v178
        %v228 = vsub.f32 %v224, %v179
        %v229 = vsub.f32 %v225, %v180
        %v230 = vlaneseq
        %v231 = vshrl.u32 %v230, 7
        %v232 = vsub.s32 3, %v231
        %v233 = vrot.slane %v181, %v232
        %v234 = vmul.f32 %v233, %v226
        %v235 = vmul.f32 %v233, %v227
        %v236 = vmul.f32 %v233, %v228
        %v237 = vmul.f32 %v233, %v229
        %v238 = vadd.f32 %v218, %v234
        %v239 = vadd.f32 %v219, %v235
        %v240 = vadd.f32 %v220, %v236
        %v241 = vadd.f32 %v221, %v237
        %242 = vst [vmem:[%s174] sm:$0xff] %v238
        %243 = vst [vmem:[%s174 + $0x8] sm:$0xff] %v239
        %244 = vst [vmem:[%s174 + $0x10] sm:$0xff] %v240
        %245 = vst [vmem:[%s174 + $0x18] sm:$0xff] %v241
        %s246 = sand.u32 %s75, 1
        %s247 = scalar_lea.sflag [#allocation4], %s246
        %s248 = sand.u32 %s75, 1
        %s249 = smul.addr %s248, 32
        %s250 = scalar_lea.vmem [#allocation7], %s249
        // Predicated region
        $region37: #{tpu_custom_call.1} parent=27 // pred_check
          %p251 = pneg %p85
        $region38: #{tpu_custom_call.1} parent=27 // pred_check_branch
          %253 = sbr.rel (%p251) target = $region40
        $region39: #{tpu_custom_call.1} parent=27 // pred_region
          %s254 = smul.u32 4, %s20
          %s256 = ssub.s32 512, 512
          %257 = vsyncadd %s247, %s256
          %s258 = smul.addr %s254, 128
          %s259 = scalar_lea.hbm %s2, %s258
          %s260 = sshll.u32 %s250, 4
          %s261 = int_to_ptr.vmem [resolvable:$true] %s260
          %266 = dma.vmem_to_hbm [thread:$0]  %s261, 512, %s259, %s247, 128, 128, 8
        $region40: #{tpu_custom_call.1} parent=27 // pred_fallthru
          _
      $region28: #{tpu_custom_call.1} parent=5 // pred_fallthru
        _
      %p267 = scmp.le.s32.totalorder 2, %s15
      // Predicated region
      $region41: #{tpu_custom_call.1} parent=5 // pred_check
        %p268 = pneg %p267
      $region42: #{tpu_custom_call.1} parent=5 // pred_check_branch
        %270 = sbr.rel (%p268) target = $region44
      $region43: #{tpu_custom_call.1} parent=5 // pred_region
        %s271 = ssub.s32 %s15, 2
        // Predicated region
        $region45: #{tpu_custom_call.1} parent=43 // pred_check
          %p272 = pneg %p91
        $region46: #{tpu_custom_call.1} parent=43 // pred_check_branch
          %274 = sbr.rel (%p272) target = $region48
        $region47: #{tpu_custom_call.1} parent=43 // pred_region
          %s275 = sand.u32 %s76, 1
          %s276 = scalar_lea.sflag [#allocation4], %s275
          %s277 = sand.u32 %s76, 1
          %s278 = smul.addr %s277, 32
          %s279 = scalar_lea.vmem [#allocation7], %s278
          %280 = dma.done %s276, 512
        $region48: #{tpu_custom_call.1} parent=43 // pred_fallthru
          _
      $region44: #{tpu_custom_call.1} parent=5 // pred_fallthru
        _
    $region6: #{tpu_custom_call.1} parent=1 // loop_footer
      %s19 = sadd.s32 1, %s15
    $region7: #{tpu_custom_call.1} parent=1 // loop_footer_branch
      %14 = sbr.rel target = $region3
    $region8: #{tpu_custom_call.1} parent=1 // loop_exit
      _
    %281 = vsyncpa [#allocation3], 1
    %s282 = scalar_lea.sflag [#allocation3], 1
    %283 = vsyncpa %s282, 1
    %284 = vsyncpa [#allocation6], 1
    %s285 = scalar_lea.sflag [#allocation6], 1
    %286 = vsyncpa %s285, 1
    %287 = vsyncpa [#allocation4], 1
    %s288 = scalar_lea.sflag [#allocation4], 1
    %289 = vsyncpa %s288, 1

</llo_original>
